<compile_context>
chip_gen: v5e
topology: v5e:2x2
jax: 0.10.0
libtpu: 0.0.40
codegen_flags: <defaults>
</compile_context>

<pallas_src>
import jax
import jax.numpy as jnp
from jax import lax
from jax.experimental import pallas as pl
from jax.experimental.pallas import tpu as pltpu  # noqa: F401  (TPU backend)

N_EMBD = 32
NUM_HEADS = 4
HEAD_SIZE = 8
E = NUM_HEADS * HEAD_SIZE  # == N_EMBD


def _make_mha_kernel(B, T):
    """Kernel over the whole (B*T, C) slab in a single invocation (no grid)."""

    def kernel(x_ref, wqkv_ref, wproj_ref, bproj_ref, o_ref):
        # x_ref:    (B*T, C)
        # wqkv_ref: (C, 3*E)   columns = [q heads (pre-scaled) | k heads | v heads]
        # wproj_ref:(E, E) = proj.weight.T
        # bproj_ref:(1, E)
        # o_ref:    (B*T, E)
        x = x_ref[...]                                                    # (B*T, C)

        # One fused QKV matmul over all batch rows (M = B*T).
        qkv = jnp.dot(x, wqkv_ref[...], preferred_element_type=jnp.float32)  # (B*T, 3E)

        # Additive causal-mask bias, built once and reused by every (b, h).
        row = lax.broadcasted_iota(jnp.int32, (T, T), 0)
        col = lax.broadcasted_iota(jnp.int32, (T, T), 1)
        mask_bias = jnp.where(row >= col, jnp.float32(0.0), -jnp.inf)    # (T, T)

        bias = bproj_ref[...].astype(jnp.float32)                        # (1, E)

        for b in range(B):                                               # B=2, static
            r0 = b * T
            # Per-batch output accumulator, initialized with the projection bias.
            y_b = jnp.broadcast_to(bias, (T, E))

            for h in range(NUM_HEADS):                                   # H=4, static
                c0 = h * HEAD_SIZE
                q = qkv[r0:r0 + T, c0:c0 + HEAD_SIZE]                    # (T, hs), pre-scaled
                k = qkv[r0:r0 + T, E + c0:E + c0 + HEAD_SIZE]            # (T, hs)
                v = qkv[r0:r0 + T, 2 * E + c0:2 * E + c0 + HEAD_SIZE]    # (T, hs)

                # q @ k^T without explicit transpose: contract last dims directly.
                wei = lax.dot_general(q, k, (((1,), (1,)), ((), ())),
                                      preferred_element_type=jnp.float32)  # (T, T)
                wei = wei + mask_bias                                    # masked_fill(-inf)

                # softmax over last dim (diagonal always unmasked -> safe).
                wei = jnp.exp(wei - jnp.max(wei, axis=-1, keepdims=True))
                inv = pl.reciprocal(jnp.sum(wei, axis=-1, keepdims=True), approx=True)
                p = wei * inv
                # dropout(wei): identity in eval mode

                head_out = jnp.dot(p, v, preferred_element_type=jnp.float32)  # (T, hs)

                # Per-head projection accumulation (replaces concat + full proj matmul).
                y_b = y_b + jnp.dot(head_out,
                                    wproj_ref[c0:c0 + HEAD_SIZE, :],
                                    preferred_element_type=jnp.float32)  # (T, E)

            # dropout(proj): identity in eval mode
            o_ref[r0:r0 + T, :] = y_b.astype(o_ref.dtype)                # contiguous store

    return kernel


def multi_head_attention(x, wq, wk, wv, w_proj, b_proj):
    """x: (B, T, C); wq/wk/wv: (H, C, hs) (already-transposed Linear weights);
    w_proj: (E, E) = proj.weight.T; b_proj: (1, E)."""
    B, T, C = x.shape
    H, _, hs = wq.shape
    assert C == N_EMBD and H * hs == N_EMBD

    # Pre-concatenate all QKV weights into one (C, 3*E) matrix; fold the
    # 1/sqrt(C) attention scale into the q-columns (trace-time constant).
    scale = jnp.float32(C) ** -0.5
    wq_all = jnp.transpose(wq, (1, 0, 2)).reshape(C, H * hs) * scale     # (C, E)
    wk_all = jnp.transpose(wk, (1, 0, 2)).reshape(C, H * hs)             # (C, E)
    wv_all = jnp.transpose(wv, (1, 0, 2)).reshape(C, H * hs)             # (C, E)
    w_qkv = jnp.concatenate([wq_all, wk_all, wv_all], axis=-1)           # (C, 3E)

    x2d = x.reshape(B * T, C)                                            # fold B into M

    out2d = pl.pallas_call(
        _make_mha_kernel(B, T),
        out_shape=jax.ShapeDtypeStruct((B * T, E), x.dtype),
        # No grid: single invocation; all operands (~21 KiB total) live whole in VMEM.
    )(x2d, w_qkv, w_proj, b_proj)

    return out2d.reshape(B, T, E)


def _reference(x, wq, wk, wv, w_proj, b_proj):
    B, T, C = x.shape
    outs = []
    for h in range(wq.shape[0]):
        q = x @ wq[h]
        k = x @ wk[h]
        v = x @ wv[h]
        wei = (q @ jnp.swapaxes(k, -2, -1)) * (C ** -0.5)
        mask = jnp.tril(jnp.ones((T, T), bool))
        wei = jnp.where(mask, wei, -jnp.inf)
        wei = jax.nn.softmax(wei, axis=-1)
        outs.append(wei @ v)
    cat = jnp.concatenate(outs, axis=-1)
    return cat @ w_proj + b_proj


if __name__ == "__main__":
    B, T = 2, 8
    key = jax.random.PRNGKey(0)
    kx, kq, kk, kv, kw, kb = jax.random.split(key, 6)

    x = jax.random.normal(kx, (B, T, N_EMBD), jnp.float32)

    # nn.Linear(n_embd, head_size, bias=False).weight has shape (hs, n_embd);
    # kernels consume W^T of shape (n_embd, hs), one per head.
    wq = 0.05 * jax.random.normal(kq, (NUM_HEADS, N_EMBD, HEAD_SIZE), jnp.float32)
    wk = 0.05 * jax.random.normal(kk, (NUM_HEADS, N_EMBD, HEAD_SIZE), jnp.float32)
    wv = 0.05 * jax.random.normal(kv, (NUM_HEADS, N_EMBD, HEAD_SIZE), jnp.float32)

    # nn.Linear(n_embd, n_embd): weight (E, E), bias (E,). We pass W^T and bias as (1, E).
    w_proj = 0.05 * jax.random.normal(kw, (N_EMBD, N_EMBD), jnp.float32)
    b_proj = 0.05 * jax.random.normal(kb, (1, N_EMBD), jnp.float32)

    out = multi_head_attention(x, wq, wk, wv, w_proj, b_proj)
    out = jax.block_until_ready(out)

    ref = _reference(x, wq, wk, wv, w_proj, b_proj)
    assert out.shape == (B, T, N_EMBD)
    # Tolerance slightly relaxed: softmax normalization uses the EUP approximate
    # reciprocal (pl.reciprocal(..., approx=True)).
    assert jnp.allclose(out, ref, atol=2e-3, rtol=2e-3), "mismatch vs reference"

    print("KERNEL_OK")
</pallas_src>

<mosaic_0001>
module attributes {stable_mosaic.version = 11 : i64} {
  func.func @kernel(%arg0: memref<16x32xf32, #tpu.memory_space<vmem>>, %arg1: memref<32x96xf32, #tpu.memory_space<vmem>>, %arg2: memref<32x32xf32, #tpu.memory_space<vmem>>, %arg3: memref<1x32xf32, #tpu.memory_space<vmem>>, %arg4: memref<16x32xf32, #tpu.memory_space<vmem>>) attributes {dimension_semantics = [], scalar_prefetch = 0 : i64, scratch_operands = 0 : i64, tpu.core_type = #tpu.core_type<tc>} {
    %c0 = arith.constant 0 : index
    %c0_0 = arith.constant 0 : index
    %0 = vector.load %arg0[%c0, %c0_0] : memref<16x32xf32, #tpu.memory_space<vmem>>, vector<16x32xf32>
    %c0_1 = arith.constant 0 : index
    %c0_2 = arith.constant 0 : index
    %1 = vector.load %arg1[%c0_1, %c0_2] : memref<32x96xf32, #tpu.memory_space<vmem>>, vector<32x96xf32>
    %cst = arith.constant dense<0.000000e+00> : vector<16x96xf32>
    %2 = tpu.matmul %0, %1, %cst {dimension_numbers = #tpu.dot_dimension_numbers<[1], [0], [0], [1], [0, 0, 1, 1], [], []>} : vector<16x32xf32>, vector<32x96xf32>, vector<16x96xf32> -> vector<16x96xf32>
    %3 = tpu.iota {dimensions = array<i32: 0>} : vector<8x8xi32>
    %4 = tpu.iota {dimensions = array<i32: 1>} : vector<8x8xi32>
    %5 = arith.cmpi sge, %3, %4 : vector<8x8xi32>
    %cst_3 = arith.constant 0.000000e+00 : f32
    %cst_4 = arith.constant 0xFF800000 : f32
    %6 = vector.broadcast %cst_3 : f32 to vector<8x8xf32>
    %7 = vector.broadcast %cst_4 : f32 to vector<8x8xf32>
    %8 = arith.select %5, %6, %7 : vector<8x8xi1>, vector<8x8xf32>
    %c0_5 = arith.constant 0 : index
    %c0_6 = arith.constant 0 : index
    %9 = vector.load %arg3[%c0_5, %c0_6] : memref<1x32xf32, #tpu.memory_space<vmem>>, vector<1x32xf32>
    %10 = vector.shape_cast %9 : vector<1x32xf32> to vector<1x32xf32>
    %11 = vector.broadcast %10 : vector<1x32xf32> to vector<8x32xf32>
    %12 = vector.extract_strided_slice %2 {offsets = [0, 0], sizes = [8, 8], strides = [1, 1]} : vector<16x96xf32> to vector<8x8xf32>
    %13 = vector.extract_strided_slice %2 {offsets = [0, 32], sizes = [8, 8], strides = [1, 1]} : vector<16x96xf32> to vector<8x8xf32>
    %14 = vector.extract_strided_slice %2 {offsets = [0, 64], sizes = [8, 8], strides = [1, 1]} : vector<16x96xf32> to vector<8x8xf32>
    %cst_7 = arith.constant dense<0.000000e+00> : vector<8x8xf32>
    %15 = tpu.matmul %12, %13, %cst_7 {dimension_numbers = #tpu.dot_dimension_numbers<[1], [1], [0], [0], [0, 0, 1, 0], [], []>} : vector<8x8xf32>, vector<8x8xf32>, vector<8x8xf32> -> vector<8x8xf32>
    %16 = arith.addf %15, %8 : vector<8x8xf32>
    %cst_8 = arith.constant dense<0xFF800000> : vector<8xf32>
    %17 = vector.multi_reduction <maximumf>, %16, %cst_8 [1] : vector<8x8xf32> to vector<8xf32>
    %18 = vector.shape_cast %17 : vector<8xf32> to vector<8x1xf32>
    %19 = vector.broadcast %18 : vector<8x1xf32> to vector<8x8xf32>
    %20 = arith.subf %16, %19 : vector<8x8xf32>
    %21 = math.exp %20 : vector<8x8xf32>
    %cst_9 = arith.constant dense<0.000000e+00> : vector<8xf32>
    %22 = vector.multi_reduction <add>, %21, %cst_9 [1] : vector<8x8xf32> to vector<8xf32>
    %23 = vector.shape_cast %22 : vector<8xf32> to vector<8x1xf32>
    %24 = tpu.reciprocal %23 {approx = true} : vector<8x1xf32> -> vector<8x1xf32>
    %25 = vector.broadcast %24 : vector<8x1xf32> to vector<8x8xf32>
    %26 = arith.mulf %21, %25 : vector<8x8xf32>
    %cst_10 = arith.constant dense<0.000000e+00> : vector<8x8xf32>
    %27 = tpu.matmul %26, %14, %cst_10 {dimension_numbers = #tpu.dot_dimension_numbers<[1], [0], [0], [1], [0, 0, 1, 1], [], []>} : vector<8x8xf32>, vector<8x8xf32>, vector<8x8xf32> -> vector<8x8xf32>
    %c0_11 = arith.constant 0 : index
    %c0_12 = arith.constant 0 : index
    %28 = vector.load %arg2[%c0_11, %c0_12] : memref<32x32xf32, #tpu.memory_space<vmem>>, vector<8x32xf32>
    %cst_13 = arith.constant dense<0.000000e+00> : vector<8x32xf32>
    %29 = tpu.matmul %27, %28, %cst_13 {dimension_numbers = #tpu.dot_dimension_numbers<[1], [0], [0], [1], [0, 0, 1, 1], [], []>} : vector<8x8xf32>, vector<8x32xf32>, vector<8x32xf32> -> vector<8x32xf32>
    %30 = arith.addf %11, %29 : vector<8x32xf32>
    %31 = vector.extract_strided_slice %2 {offsets = [0, 8], sizes = [8, 8], strides = [1, 1]} : vector<16x96xf32> to vector<8x8xf32>
    %32 = vector.extract_strided_slice %2 {offsets = [0, 40], sizes = [8, 8], strides = [1, 1]} : vector<16x96xf32> to vector<8x8xf32>
    %33 = vector.extract_strided_slice %2 {offsets = [0, 72], sizes = [8, 8], strides = [1, 1]} : vector<16x96xf32> to vector<8x8xf32>
    %cst_14 = arith.constant dense<0.000000e+00> : vector<8x8xf32>
    %34 = tpu.matmul %31, %32, %cst_14 {dimension_numbers = #tpu.dot_dimension_numbers<[1], [1], [0], [0], [0, 0, 1, 0], [], []>} : vector<8x8xf32>, vector<8x8xf32>, vector<8x8xf32> -> vector<8x8xf32>
    %35 = arith.addf %34, %8 : vector<8x8xf32>
    %cst_15 = arith.constant dense<0xFF800000> : vector<8xf32>
    %36 = vector.multi_reduction <maximumf>, %35, %cst_15 [1] : vector<8x8xf32> to vector<8xf32>
    %37 = vector.shape_cast %36 : vector<8xf32> to vector<8x1xf32>
    %38 = vector.broadcast %37 : vector<8x1xf32> to vector<8x8xf32>
    %39 = arith.subf %35, %38 : vector<8x8xf32>
    %40 = math.exp %39 : vector<8x8xf32>
    %cst_16 = arith.constant dense<0.000000e+00> : vector<8xf32>
    %41 = vector.multi_reduction <add>, %40, %cst_16 [1] : vector<8x8xf32> to vector<8xf32>
    %42 = vector.shape_cast %41 : vector<8xf32> to vector<8x1xf32>
    %43 = tpu.reciprocal %42 {approx = true} : vector<8x1xf32> -> vector<8x1xf32>
    %44 = vector.broadcast %43 : vector<8x1xf32> to vector<8x8xf32>
    %45 = arith.mulf %40, %44 : vector<8x8xf32>
    %cst_17 = arith.constant dense<0.000000e+00> : vector<8x8xf32>
    %46 = tpu.matmul %45, %33, %cst_17 {dimension_numbers = #tpu.dot_dimension_numbers<[1], [0], [0], [1], [0, 0, 1, 1], [], []>} : vector<8x8xf32>, vector<8x8xf32>, vector<8x8xf32> -> vector<8x8xf32>
    %c8 = arith.constant 8 : index
    %c0_18 = arith.constant 0 : index
    %47 = vector.load %arg2[%c8, %c0_18] : memref<32x32xf32, #tpu.memory_space<vmem>>, vector<8x32xf32>
    %cst_19 = arith.constant dense<0.000000e+00> : vector<8x32xf32>
    %48 = tpu.matmul %46, %47, %cst_19 {dimension_numbers = #tpu.dot_dimension_numbers<[1], [0], [0], [1], [0, 0, 1, 1], [], []>} : vector<8x8xf32>, vector<8x32xf32>, vector<8x32xf32> -> vector<8x32xf32>
    %49 = arith.addf %30, %48 : vector<8x32xf32>
    %50 = vector.extract_strided_slice %2 {offsets = [0, 16], sizes = [8, 8], strides = [1, 1]} : vector<16x96xf32> to vector<8x8xf32>
    %51 = vector.extract_strided_slice %2 {offsets = [0, 48], sizes = [8, 8], strides = [1, 1]} : vector<16x96xf32> to vector<8x8xf32>
    %52 = vector.extract_strided_slice %2 {offsets = [0, 80], sizes = [8, 8], strides = [1, 1]} : vector<16x96xf32> to vector<8x8xf32>
    %cst_20 = arith.constant dense<0.000000e+00> : vector<8x8xf32>
    %53 = tpu.matmul %50, %51, %cst_20 {dimension_numbers = #tpu.dot_dimension_numbers<[1], [1], [0], [0], [0, 0, 1, 0], [], []>} : vector<8x8xf32>, vector<8x8xf32>, vector<8x8xf32> -> vector<8x8xf32>
    %54 = arith.addf %53, %8 : vector<8x8xf32>
    %cst_21 = arith.constant dense<0xFF800000> : vector<8xf32>
    %55 = vector.multi_reduction <maximumf>, %54, %cst_21 [1] : vector<8x8xf32> to vector<8xf32>
    %56 = vector.shape_cast %55 : vector<8xf32> to vector<8x1xf32>
    %57 = vector.broadcast %56 : vector<8x1xf32> to vector<8x8xf32>
    %58 = arith.subf %54, %57 : vector<8x8xf32>
    %59 = math.exp %58 : vector<8x8xf32>
    %cst_22 = arith.constant dense<0.000000e+00> : vector<8xf32>
    %60 = vector.multi_reduction <add>, %59, %cst_22 [1] : vector<8x8xf32> to vector<8xf32>
    %61 = vector.shape_cast %60 : vector<8xf32> to vector<8x1xf32>
    %62 = tpu.reciprocal %61 {approx = true} : vector<8x1xf32> -> vector<8x1xf32>
    %63 = vector.broadcast %62 : vector<8x1xf32> to vector<8x8xf32>
    %64 = arith.mulf %59, %63 : vector<8x8xf32>
    %cst_23 = arith.constant dense<0.000000e+00> : vector<8x8xf32>
    %65 = tpu.matmul %64, %52, %cst_23 {dimension_numbers = #tpu.dot_dimension_numbers<[1], [0], [0], [1], [0, 0, 1, 1], [], []>} : vector<8x8xf32>, vector<8x8xf32>, vector<8x8xf32> -> vector<8x8xf32>
    %c16 = arith.constant 16 : index
    %c0_24 = arith.constant 0 : index
    %66 = vector.load %arg2[%c16, %c0_24] : memref<32x32xf32, #tpu.memory_space<vmem>>, vector<8x32xf32>
    %cst_25 = arith.constant dense<0.000000e+00> : vector<8x32xf32>
    %67 = tpu.matmul %65, %66, %cst_25 {dimension_numbers = #tpu.dot_dimension_numbers<[1], [0], [0], [1], [0, 0, 1, 1], [], []>} : vector<8x8xf32>, vector<8x32xf32>, vector<8x32xf32> -> vector<8x32xf32>
    %68 = arith.addf %49, %67 : vector<8x32xf32>
    %69 = vector.extract_strided_slice %2 {offsets = [0, 24], sizes = [8, 8], strides = [1, 1]} : vector<16x96xf32> to vector<8x8xf32>
    %70 = vector.extract_strided_slice %2 {offsets = [0, 56], sizes = [8, 8], strides = [1, 1]} : vector<16x96xf32> to vector<8x8xf32>
    %71 = vector.extract_strided_slice %2 {offsets = [0, 88], sizes = [8, 8], strides = [1, 1]} : vector<16x96xf32> to vector<8x8xf32>
    %cst_26 = arith.constant dense<0.000000e+00> : vector<8x8xf32>
    %72 = tpu.matmul %69, %70, %cst_26 {dimension_numbers = #tpu.dot_dimension_numbers<[1], [1], [0], [0], [0, 0, 1, 0], [], []>} : vector<8x8xf32>, vector<8x8xf32>, vector<8x8xf32> -> vector<8x8xf32>
    %73 = arith.addf %72, %8 : vector<8x8xf32>
    %cst_27 = arith.constant dense<0xFF800000> : vector<8xf32>
    %74 = vector.multi_reduction <maximumf>, %73, %cst_27 [1] : vector<8x8xf32> to vector<8xf32>
    %75 = vector.shape_cast %74 : vector<8xf32> to vector<8x1xf32>
    %76 = vector.broadcast %75 : vector<8x1xf32> to vector<8x8xf32>
    %77 = arith.subf %73, %76 : vector<8x8xf32>
    %78 = math.exp %77 : vector<8x8xf32>
    %cst_28 = arith.constant dense<0.000000e+00> : vector<8xf32>
    %79 = vector.multi_reduction <add>, %78, %cst_28 [1] : vector<8x8xf32> to vector<8xf32>
    %80 = vector.shape_cast %79 : vector<8xf32> to vector<8x1xf32>
    %81 = tpu.reciprocal %80 {approx = true} : vector<8x1xf32> -> vector<8x1xf32>
    %82 = vector.broadcast %81 : vector<8x1xf32> to vector<8x8xf32>
    %83 = arith.mulf %78, %82 : vector<8x8xf32>
    %cst_29 = arith.constant dense<0.000000e+00> : vector<8x8xf32>
    %84 = tpu.matmul %83, %71, %cst_29 {dimension_numbers = #tpu.dot_dimension_numbers<[1], [0], [0], [1], [0, 0, 1, 1], [], []>} : vector<8x8xf32>, vector<8x8xf32>, vector<8x8xf32> -> vector<8x8xf32>
    %c24 = arith.constant 24 : index
    %c0_30 = arith.constant 0 : index
    %85 = vector.load %arg2[%c24, %c0_30] : memref<32x32xf32, #tpu.memory_space<vmem>>, vector<8x32xf32>
    %cst_31 = arith.constant dense<0.000000e+00> : vector<8x32xf32>
    %86 = tpu.matmul %84, %85, %cst_31 {dimension_numbers = #tpu.dot_dimension_numbers<[1], [0], [0], [1], [0, 0, 1, 1], [], []>} : vector<8x8xf32>, vector<8x32xf32>, vector<8x32xf32> -> vector<8x32xf32>
    %87 = arith.addf %68, %86 : vector<8x32xf32>
    %c0_32 = arith.constant 0 : index
    %c0_33 = arith.constant 0 : index
    %88 = vector.load %arg4[%c0_32, %c0_33] : memref<16x32xf32, #tpu.memory_space<vmem>>, vector<8x32xf32>
    tpu.vector_store %arg4[%c0_32, %c0_33], %87 {strides = array<i32>} : memref<16x32xf32, #tpu.memory_space<vmem>>, vector<8x32xf32>,
    %89 = vector.shape_cast %9 : vector<1x32xf32> to vector<1x32xf32>
    %90 = vector.broadcast %89 : vector<1x32xf32> to vector<8x32xf32>
    %91 = vector.extract_strided_slice %2 {offsets = [8, 0], sizes = [8, 8], strides = [1, 1]} : vector<16x96xf32> to vector<8x8xf32>
    %92 = vector.extract_strided_slice %2 {offsets = [8, 32], sizes = [8, 8], strides = [1, 1]} : vector<16x96xf32> to vector<8x8xf32>
    %93 = vector.extract_strided_slice %2 {offsets = [8, 64], sizes = [8, 8], strides = [1, 1]} : vector<16x96xf32> to vector<8x8xf32>
    %cst_34 = arith.constant dense<0.000000e+00> : vector<8x8xf32>
    %94 = tpu.matmul %91, %92, %cst_34 {dimension_numbers = #tpu.dot_dimension_numbers<[1], [1], [0], [0], [0, 0, 1, 0], [], []>} : vector<8x8xf32>, vector<8x8xf32>, vector<8x8xf32> -> vector<8x8xf32>
    %95 = arith.addf %94, %8 : vector<8x8xf32>
    %cst_35 = arith.constant dense<0xFF800000> : vector<8xf32>
    %96 = vector.multi_reduction <maximumf>, %95, %cst_35 [1] : vector<8x8xf32> to vector<8xf32>
    %97 = vector.shape_cast %96 : vector<8xf32> to vector<8x1xf32>
    %98 = vector.broadcast %97 : vector<8x1xf32> to vector<8x8xf32>
    %99 = arith.subf %95, %98 : vector<8x8xf32>
    %100 = math.exp %99 : vector<8x8xf32>
    %cst_36 = arith.constant dense<0.000000e+00> : vector<8xf32>
    %101 = vector.multi_reduction <add>, %100, %cst_36 [1] : vector<8x8xf32> to vector<8xf32>
    %102 = vector.shape_cast %101 : vector<8xf32> to vector<8x1xf32>
    %103 = tpu.reciprocal %102 {approx = true} : vector<8x1xf32> -> vector<8x1xf32>
    %104 = vector.broadcast %103 : vector<8x1xf32> to vector<8x8xf32>
    %105 = arith.mulf %100, %104 : vector<8x8xf32>
    %cst_37 = arith.constant dense<0.000000e+00> : vector<8x8xf32>
    %106 = tpu.matmul %105, %93, %cst_37 {dimension_numbers = #tpu.dot_dimension_numbers<[1], [0], [0], [1], [0, 0, 1, 1], [], []>} : vector<8x8xf32>, vector<8x8xf32>, vector<8x8xf32> -> vector<8x8xf32>
    %c0_38 = arith.constant 0 : index
    %c0_39 = arith.constant 0 : index
    %107 = vector.load %arg2[%c0_38, %c0_39] : memref<32x32xf32, #tpu.memory_space<vmem>>, vector<8x32xf32>
    %cst_40 = arith.constant dense<0.000000e+00> : vector<8x32xf32>
    %108 = tpu.matmul %106, %107, %cst_40 {dimension_numbers = #tpu.dot_dimension_numbers<[1], [0], [0], [1], [0, 0, 1, 1], [], []>} : vector<8x8xf32>, vector<8x32xf32>, vector<8x32xf32> -> vector<8x32xf32>
    %109 = arith.addf %90, %108 : vector<8x32xf32>
    %110 = vector.extract_strided_slice %2 {offsets = [8, 8], sizes = [8, 8], strides = [1, 1]} : vector<16x96xf32> to vector<8x8xf32>
    %111 = vector.extract_strided_slice %2 {offsets = [8, 40], sizes = [8, 8], strides = [1, 1]} : vector<16x96xf32> to vector<8x8xf32>
    %112 = vector.extract_strided_slice %2 {offsets = [8, 72], sizes = [8, 8], strides = [1, 1]} : vector<16x96xf32> to vector<8x8xf32>
    %cst_41 = arith.constant dense<0.000000e+00> : vector<8x8xf32>
    %113 = tpu.matmul %110, %111, %cst_41 {dimension_numbers = #tpu.dot_dimension_numbers<[1], [1], [0], [0], [0, 0, 1, 0], [], []>} : vector<8x8xf32>, vector<8x8xf32>, vector<8x8xf32> -> vector<8x8xf32>
    %114 = arith.addf %113, %8 : vector<8x8xf32>
    %cst_42 = arith.constant dense<0xFF800000> : vector<8xf32>
    %115 = vector.multi_reduction <maximumf>, %114, %cst_42 [1] : vector<8x8xf32> to vector<8xf32>
    %116 = vector.shape_cast %115 : vector<8xf32> to vector<8x1xf32>
    %117 = vector.broadcast %116 : vector<8x1xf32> to vector<8x8xf32>
    %118 = arith.subf %114, %117 : vector<8x8xf32>
    %119 = math.exp %118 : vector<8x8xf32>
    %cst_43 = arith.constant dense<0.000000e+00> : vector<8xf32>
    %120 = vector.multi_reduction <add>, %119, %cst_43 [1] : vector<8x8xf32> to vector<8xf32>
    %121 = vector.shape_cast %120 : vector<8xf32> to vector<8x1xf32>
    %122 = tpu.reciprocal %121 {approx = true} : vector<8x1xf32> -> vector<8x1xf32>
    %123 = vector.broadcast %122 : vector<8x1xf32> to vector<8x8xf32>
    %124 = arith.mulf %119, %123 : vector<8x8xf32>
    %cst_44 = arith.constant dense<0.000000e+00> : vector<8x8xf32>
    %125 = tpu.matmul %124, %112, %cst_44 {dimension_numbers = #tpu.dot_dimension_numbers<[1], [0], [0], [1], [0, 0, 1, 1], [], []>} : vector<8x8xf32>, vector<8x8xf32>, vector<8x8xf32> -> vector<8x8xf32>
    %c8_45 = arith.constant 8 : index
    %c0_46 = arith.constant 0 : index
    %126 = vector.load %arg2[%c8_45, %c0_46] : memref<32x32xf32, #tpu.memory_space<vmem>>, vector<8x32xf32>
    %cst_47 = arith.constant dense<0.000000e+00> : vector<8x32xf32>
    %127 = tpu.matmul %125, %126, %cst_47 {dimension_numbers = #tpu.dot_dimension_numbers<[1], [0], [0], [1], [0, 0, 1, 1], [], []>} : vector<8x8xf32>, vector<8x32xf32>, vector<8x32xf32> -> vector<8x32xf32>
    %128 = arith.addf %109, %127 : vector<8x32xf32>
    %129 = vector.extract_strided_slice %2 {offsets = [8, 16], sizes = [8, 8], strides = [1, 1]} : vector<16x96xf32> to vector<8x8xf32>
    %130 = vector.extract_strided_slice %2 {offsets = [8, 48], sizes = [8, 8], strides = [1, 1]} : vector<16x96xf32> to vector<8x8xf32>
    %131 = vector.extract_strided_slice %2 {offsets = [8, 80], sizes = [8, 8], strides = [1, 1]} : vector<16x96xf32> to vector<8x8xf32>
    %cst_48 = arith.constant dense<0.000000e+00> : vector<8x8xf32>
    %132 = tpu.matmul %129, %130, %cst_48 {dimension_numbers = #tpu.dot_dimension_numbers<[1], [1], [0], [0], [0, 0, 1, 0], [], []>} : vector<8x8xf32>, vector<8x8xf32>, vector<8x8xf32> -> vector<8x8xf32>
    %133 = arith.addf %132, %8 : vector<8x8xf32>
    %cst_49 = arith.constant dense<0xFF800000> : vector<8xf32>
    %134 = vector.multi_reduction <maximumf>, %133, %cst_49 [1] : vector<8x8xf32> to vector<8xf32>
    %135 = vector.shape_cast %134 : vector<8xf32> to vector<8x1xf32>
    %136 = vector.broadcast %135 : vector<8x1xf32> to vector<8x8xf32>
    %137 = arith.subf %133, %136 : vector<8x8xf32>
    %138 = math.exp %137 : vector<8x8xf32>
    %cst_50 = arith.constant dense<0.000000e+00> : vector<8xf32>
    %139 = vector.multi_reduction <add>, %138, %cst_50 [1] : vector<8x8xf32> to vector<8xf32>
    %140 = vector.shape_cast %139 : vector<8xf32> to vector<8x1xf32>
    %141 = tpu.reciprocal %140 {approx = true} : vector<8x1xf32> -> vector<8x1xf32>
    %142 = vector.broadcast %141 : vector<8x1xf32> to vector<8x8xf32>
    %143 = arith.mulf %138, %142 : vector<8x8xf32>
    %cst_51 = arith.constant dense<0.000000e+00> : vector<8x8xf32>
    %144 = tpu.matmul %143, %131, %cst_51 {dimension_numbers = #tpu.dot_dimension_numbers<[1], [0], [0], [1], [0, 0, 1, 1], [], []>} : vector<8x8xf32>, vector<8x8xf32>, vector<8x8xf32> -> vector<8x8xf32>
    %c16_52 = arith.constant 16 : index
    %c0_53 = arith.constant 0 : index
    %145 = vector.load %arg2[%c16_52, %c0_53] : memref<32x32xf32, #tpu.memory_space<vmem>>, vector<8x32xf32>
    %cst_54 = arith.constant dense<0.000000e+00> : vector<8x32xf32>
    %146 = tpu.matmul %144, %145, %cst_54 {dimension_numbers = #tpu.dot_dimension_numbers<[1], [0], [0], [1], [0, 0, 1, 1], [], []>} : vector<8x8xf32>, vector<8x32xf32>, vector<8x32xf32> -> vector<8x32xf32>
    %147 = arith.addf %128, %146 : vector<8x32xf32>
    %148 = vector.extract_strided_slice %2 {offsets = [8, 24], sizes = [8, 8], strides = [1, 1]} : vector<16x96xf32> to vector<8x8xf32>
    %149 = vector.extract_strided_slice %2 {offsets = [8, 56], sizes = [8, 8], strides = [1, 1]} : vector<16x96xf32> to vector<8x8xf32>
    %150 = vector.extract_strided_slice %2 {offsets = [8, 88], sizes = [8, 8], strides = [1, 1]} : vector<16x96xf32> to vector<8x8xf32>
    %cst_55 = arith.constant dense<0.000000e+00> : vector<8x8xf32>
    %151 = tpu.matmul %148, %149, %cst_55 {dimension_numbers = #tpu.dot_dimension_numbers<[1], [1], [0], [0], [0, 0, 1, 0], [], []>} : vector<8x8xf32>, vector<8x8xf32>, vector<8x8xf32> -> vector<8x8xf32>
    %152 = arith.addf %151, %8 : vector<8x8xf32>
    %cst_56 = arith.constant dense<0xFF800000> : vector<8xf32>
    %153 = vector.multi_reduction <maximumf>, %152, %cst_56 [1] : vector<8x8xf32> to vector<8xf32>
    %154 = vector.shape_cast %153 : vector<8xf32> to vector<8x1xf32>
    %155 = vector.broadcast %154 : vector<8x1xf32> to vector<8x8xf32>
    %156 = arith.subf %152, %155 : vector<8x8xf32>
    %157 = math.exp %156 : vector<8x8xf32>
    %cst_57 = arith.constant dense<0.000000e+00> : vector<8xf32>
    %158 = vector.multi_reduction <add>, %157, %cst_57 [1] : vector<8x8xf32> to vector<8xf32>
    %159 = vector.shape_cast %158 : vector<8xf32> to vector<8x1xf32>
    %160 = tpu.reciprocal %159 {approx = true} : vector<8x1xf32> -> vector<8x1xf32>
    %161 = vector.broadcast %160 : vector<8x1xf32> to vector<8x8xf32>
    %162 = arith.mulf %157, %161 : vector<8x8xf32>
    %cst_58 = arith.constant dense<0.000000e+00> : vector<8x8xf32>
    %163 = tpu.matmul %162, %150, %cst_58 {dimension_numbers = #tpu.dot_dimension_numbers<[1], [0], [0], [1], [0, 0, 1, 1], [], []>} : vector<8x8xf32>, vector<8x8xf32>, vector<8x8xf32> -> vector<8x8xf32>
    %c24_59 = arith.constant 24 : index
    %c0_60 = arith.constant 0 : index
    %164 = vector.load %arg2[%c24_59, %c0_60] : memref<32x32xf32, #tpu.memory_space<vmem>>, vector<8x32xf32>
    %cst_61 = arith.constant dense<0.000000e+00> : vector<8x32xf32>
    %165 = tpu.matmul %163, %164, %cst_61 {dimension_numbers = #tpu.dot_dimension_numbers<[1], [0], [0], [1], [0, 0, 1, 1], [], []>} : vector<8x8xf32>, vector<8x32xf32>, vector<8x32xf32> -> vector<8x32xf32>
    %166 = arith.addf %147, %165 : vector<8x32xf32>
    %c8_62 = arith.constant 8 : index
    %c0_63 = arith.constant 0 : index
    %167 = vector.load %arg4[%c8_62, %c0_63] : memref<16x32xf32, #tpu.memory_space<vmem>>, vector<8x32xf32>
    tpu.vector_store %arg4[%c8_62, %c0_63], %166 {strides = array<i32>} : memref<16x32xf32, #tpu.memory_space<vmem>>, vector<8x32xf32>,
    return
  }
}

</mosaic_0001>

<llo_original>
// kernel: tpu_custom_call.1
$region0: #{tpu_custom_call.1}
  #allocation0 [shape = 'u32[]', space=smem, size = 0x4, offset = 0x4, fixed_abs, tag = 'smem constant byte address 0x4 - core index']
  #allocation1 [shape = 'u32[72,128]{1,0:T(1,128)}', space=vmem, size = 0x9000, scoped, tag = 'internal scratch']
  %s0 = inlined_call_operand.hbm [shape: f32[16,32], index: 0, kind: input, shape index: {}]
  %s1 = inlined_call_operand.hbm [shape: f32[32,96], index: 1, kind: input, shape index: {}]
  %s2 = inlined_call_operand.hbm [shape: f32[32,32], index: 2, kind: input, shape index: {}]
  %s3 = inlined_call_operand.vmem [shape: f32[1,32], index: 3, kind: input, shape index: {}]
  %s4 = inlined_call_operand.hbm [shape: f32[16,32], index: 4, kind: output, shape index: {}]
  %s5 = sld [smem:[#allocation0]]
  $region38: #{tpu_custom_call.1} parent=0
    _
  %s7 = ssub.s32 1, %s5
  %s8 = scalar_select 0, %s7, %s5
  $region1: #{tpu_custom_call.1} parent=0
    #allocation2 [shape = 'u8[8192]{0}', space=vmem, size = 0x2000, scoped, tag = 'input window, operand 0, single buffered']
    #allocation3 [shape = 's32[1]{0}', space=sflag, size = 0x4, scoped, tag = 'scoped memory for tpu_custom_call.1']
    #allocation4 [shape = 's32[1]{0}', space=sflag, size = 0x4, scoped, tag = 'scoped memory for tpu_custom_call.1']
    #allocation5 [shape = 'u8[16384]{0}', space=vmem, size = 0x4000, scoped, tag = 'input window, operand 1, single buffered']
    #allocation6 [shape = 's32[1]{0}', space=sflag, size = 0x4, scoped, tag = 'scoped memory for tpu_custom_call.1']
    #allocation7 [shape = 'u8[16384]{0}', space=vmem, size = 0x4000, scoped, tag = 'input window, operand 2, single buffered']
    #allocation8 [shape = 'u8[8192]{0}', space=vmem, size = 0x2000, scoped, tag = 'output window, operand 0, single buffered']
    %9 = vsyncpa [#allocation3], 0
    %10 = vsyncpa [#allocation6], 0
    %11 = vsyncpa [#allocation4], 0
    // Predicated region
    $region2: #{tpu_custom_call.1} parent=1 // pred_check
      _
    $region3: #{tpu_custom_call.1} parent=1 // pred_check_branch
      %13 = sbr.rel (0) target = $region5
    $region4: #{tpu_custom_call.1} parent=1 // pred_region
      %15 = vsyncadd [#allocation3], 0
      %s16 = sshll.u32 %s0, 4
      %s17 = int_to_ptr.hbm [resolvable:$true] %s16
      %s18 = sshll.u32 [#allocation2], 4
      %s19 = int_to_ptr.vmem [resolvable:$true] %s18
      %24 = dma.hbm_to_vmem [thread:$0]  %s17, 256, %s19, [#allocation3], 128, 128, 8
    $region5: #{tpu_custom_call.1} parent=1 // pred_fallthru
      _
    // Predicated region
    $region6: #{tpu_custom_call.1} parent=1 // pred_check
      _
    $region7: #{tpu_custom_call.1} parent=1 // pred_check_branch
      %26 = sbr.rel (0) target = $region9
    $region8: #{tpu_custom_call.1} parent=1 // pred_region
      %28 = vsyncadd [#allocation6], 0
      %s29 = sshll.u32 %s1, 4
      %s30 = int_to_ptr.hbm [resolvable:$true] %s29
      %s31 = sshll.u32 [#allocation5], 4
      %s32 = int_to_ptr.vmem [resolvable:$true] %s31
      %37 = dma.hbm_to_vmem [thread:$0]  %s30, 512, %s32, [#allocation6], 128, 128, 8
    $region9: #{tpu_custom_call.1} parent=1 // pred_fallthru
      _
    // Predicated region
    $region10: #{tpu_custom_call.1} parent=1 // pred_check
      _
    $region11: #{tpu_custom_call.1} parent=1 // pred_check_branch
      %39 = sbr.rel (0) target = $region13
    $region12: #{tpu_custom_call.1} parent=1 // pred_region
      %41 = vsyncadd [#allocation6], 0
      %s42 = sshll.u32 %s2, 4
      %s43 = int_to_ptr.hbm [resolvable:$true] %s42
      %s44 = sshll.u32 [#allocation7], 4
      %s45 = int_to_ptr.vmem [resolvable:$true] %s44
      %50 = dma.hbm_to_vmem [thread:$0]  %s43, 512, %s45, [#allocation6], 128, 128, 8
    $region13: #{tpu_custom_call.1} parent=1 // pred_fallthru
      _
    // Predicated region
    $region14: #{tpu_custom_call.1} parent=1 // pred_check
      _
    $region15: #{tpu_custom_call.1} parent=1 // pred_check_branch
      %52 = sbr.rel (0) target = $region17
    $region16: #{tpu_custom_call.1} parent=1 // pred_region
      _
    $region17: #{tpu_custom_call.1} parent=1 // pred_fallthru
      _
    // Predicated region
    $region18: #{tpu_custom_call.1} parent=1 // pred_check
      _
    $region19: #{tpu_custom_call.1} parent=1 // pred_check_branch
      %54 = sbr.rel (0) target = $region21
    $region20: #{tpu_custom_call.1} parent=1 // pred_region
      %56 = dma.done [#allocation3], 256
    $region21: #{tpu_custom_call.1} parent=1 // pred_fallthru
      _
    // Predicated region
    $region22: #{tpu_custom_call.1} parent=1 // pred_check
      _
    $region23: #{tpu_custom_call.1} parent=1 // pred_check_branch
      %58 = sbr.rel (0) target = $region25
    $region24: #{tpu_custom_call.1} parent=1 // pred_region
      %60 = dma.done [#allocation6], 512
    $region25: #{tpu_custom_call.1} parent=1 // pred_fallthru
      _
    // Predicated region
    $region26: #{tpu_custom_call.1} parent=1 // pred_check
      _
    $region27: #{tpu_custom_call.1} parent=1 // pred_check_branch
      %62 = sbr.rel (0) target = $region29
    $region28: #{tpu_custom_call.1} parent=1 // pred_region
      %64 = dma.done [#allocation6], 512
    $region29: #{tpu_custom_call.1} parent=1 // pred_fallthru
      _
    %v65 = vld [vmem:[#allocation2] sm:$0xff]
    %v66 = vld [vmem:[#allocation2 + $0x8] sm:$0xff]
    %v67 = vld [vmem:[#allocation5] sm:$0xff]
    %v68 = vld [vmem:[#allocation5 + $0x8] sm:$0xff]
    %v69 = vld [vmem:[#allocation5 + $0x10] sm:$0xff]
    %v70 = vld [vmem:[#allocation5 + $0x18] sm:$0xff]
    %vm71 = vcmask 261120
    %v73 = vsel %vm71, %v65, 0
    %v76 = vsel %vm71, %v66, 0
    %78 = vmatpush.msra.mxu0 0.0
    %79 = vmatpush.msra.mxu0 0.0
    %80 = vmatpush.msra.mxu0 0.0
    %81 = vmatpush.msra.mxu0 0.0
    %82 = vmatpush.msra.mxu0 0.0
    %83 = vmatpush.msra.mxu0 0.0
    %84 = vmatpush.msra.mxu0 0.0
    %85 = vmatpush.msra.mxu0 0.0
    %86 = vmatpush.msra.mxu0 0.0
    %87 = vmatpush.msra.mxu0 0.0
    %88 = vmatpush.msra.mxu0 0.0
    %89 = vmatpush.msra.mxu0 0.0
    %90 = vmatpush.msra.mxu0 %v70
    %91 = vmatpush.msra.mxu0 %v69
    %92 = vmatpush.msra.mxu0 %v68
    %93 = vmatpush.msra.mxu0 %v67
    %94 = vmatmul.f32.gmra.mxu0 %v73
    %v95 = vpop.f32.mrf.mxu0
    %v96 = vadd.f32 0.0, %v95
    %97 = vmatmul.f32.gmra.mxu0 %v76
    %v98 = vpop.f32.mrf.mxu0
    %v99 = vadd.f32 0.0, %v98
    %100 = vdwg.mxu0
    %v101 = vlaneseq
    %v102 = vshrl.u32 %v101, 7
    %v103 = vlaneseq
    %v104 = vand.u32 %v103, 127
    %vm105 = vcmp.ge.s32.totalorder %v102, %v104
    %v106 = vsel %vm105, 0.0, -inf
    %v107 = vld [vmem:[%s3] sm:$0x1]
    %v109 = vperm.slane %v107, 0
    %112 = vrot.lane.b32.xlu0 %v96, 96
    %v113 = vpop.permute.xlu0 %112
    %vm114 = vcmask 64512
    %v115 = vsel %vm114, %v96, 0
    %v117 = vsel %vm114, %v113, 0
    %119 = vmatpush.xpose.msra.mxu0 0.0
    %120 = vmatpush.xpose.msra.mxu0 0.0
    %121 = vmatpush.xpose.msra.mxu0 0.0
    %122 = vmatpush.xpose.msra.mxu0 0.0
    %123 = vmatpush.xpose.msra.mxu0 0.0
    %124 = vmatpush.xpose.msra.mxu0 0.0
    %125 = vmatpush.xpose.msra.mxu0 0.0
    %126 = vmatpush.xpose.msra.mxu0 0.0
    %127 = vmatpush.xpose.msra.mxu0 0.0
    %128 = vmatpush.xpose.msra.mxu0 0.0
    %129 = vmatpush.xpose.msra.mxu0 0.0
    %130 = vmatpush.xpose.msra.mxu0 0.0
    %131 = vmatpush.xpose.msra.mxu0 0.0
    %132 = vmatpush.xpose.msra.mxu0 0.0
    %133 = vmatpush.xpose.msra.mxu0 0.0
    %134 = vmatpush.xpose.msra.mxu0 %v117
    %135 = vmatmul.f32.gmra.mxu0 %v115
    %v136 = vpop.f32.mrf.mxu0
    %v137 = vadd.f32 %v106, %v136
    %138 = vdwg.mxu0
    %v139 = vsel %vm114, %v137, -inf
    %140 = vmax.xlane.f32.xlu0 %v139
    %v141 = vpop.xlane.xlu0 %140
    %v142 = vsub.f32 %v137, %v141
    %v143 = vmul.f32 %v142, 1.442695
    %v144 = vpow.pop %v143
    %v145 = vsel %vm114, %v144, 0.0
    %146 = vadd.xlane.f32.xlu0 %v145
    %v147 = vpop.xlane.xlu0 %146
    %v148 = vrcp.pop %v147
    %v149 = vmul.f32 %v144, %v148
    %150 = vrot.lane.b32.xlu0 %v96, 64
    %v151 = vpop.permute.xlu0 %150
    %v154 = vsel %vm114, %v149, 0
    %156 = vmatpush.msra.mxu0 0.0
    %157 = vmatpush.msra.mxu0 0.0
    %158 = vmatpush.msra.mxu0 0.0
    %159 = vmatpush.msra.mxu0 0.0
    %160 = vmatpush.msra.mxu0 0.0
    %161 = vmatpush.msra.mxu0 0.0
    %162 = vmatpush.msra.mxu0 0.0
    %163 = vmatpush.msra.mxu0 0.0
    %164 = vmatpush.msra.mxu0 0.0
    %165 = vmatpush.msra.mxu0 0.0
    %166 = vmatpush.msra.mxu0 0.0
    %167 = vmatpush.msra.mxu0 0.0
    %168 = vmatpush.msra.mxu0 0.0
    %169 = vmatpush.msra.mxu0 0.0
    %170 = vmatpush.msra.mxu0 0.0
    %171 = vmatpush.msra.mxu0 %v151
    %172 = vmatmul.f32.gmra.mxu0 %v154
    %v173 = vpop.f32.mrf.mxu0
    %v174 = vadd.f32 0.0, %v173
    %175 = vdwg.mxu0
    %v176 = vld [vmem:[#allocation7] sm:$0xff]
    %v178 = vsel %vm114, %v174, 0
    %180 = vmatpush.msra.mxu0 0.0
    %181 = vmatpush.msra.mxu0 0.0
    %182 = vmatpush.msra.mxu0 0.0
    %183 = vmatpush.msra.mxu0 0.0
    %184 = vmatpush.msra.mxu0 0.0
    %185 = vmatpush.msra.mxu0 0.0
    %186 = vmatpush.msra.mxu0 0.0
    %187 = vmatpush.msra.mxu0 0.0
    %188 = vmatpush.msra.mxu0 0.0
    %189 = vmatpush.msra.mxu0 0.0
    %190 = vmatpush.msra.mxu0 0.0
    %191 = vmatpush.msra.mxu0 0.0
    %192 = vmatpush.msra.mxu0 0.0
    %193 = vmatpush.msra.mxu0 0.0
    %194 = vmatpush.msra.mxu0 0.0
    %195 = vmatpush.msra.mxu0 %v176
    %196 = vmatmul.f32.gmra.mxu0 %v178
    %v197 = vpop.f32.mrf.mxu0
    %v198 = vadd.f32 0.0, %v197
    %199 = vdwg.mxu0
    %v200 = vadd.f32 %v109, %v198
    %201 = vrot.lane.b32.xlu0 %v96, 120
    %v202 = vpop.permute.xlu0 %201
    %203 = vrot.lane.b32.xlu0 %v96, 88
    %v204 = vpop.permute.xlu0 %203
    %v205 = vsel %vm114, %v202, 0
    %v207 = vsel %vm114, %v204, 0
    %209 = vmatpush.xpose.msra.mxu0 0.0
    %210 = vmatpush.xpose.msra.mxu0 0.0
    %211 = vmatpush.xpose.msra.mxu0 0.0
    %212 = vmatpush.xpose.msra.mxu0 0.0
    %213 = vmatpush.xpose.msra.mxu0 0.0
    %214 = vmatpush.xpose.msra.mxu0 0.0
    %215 = vmatpush.xpose.msra.mxu0 0.0
    %216 = vmatpush.xpose.msra.mxu0 0.0
    %217 = vmatpush.xpose.msra.mxu0 0.0
    %218 = vmatpush.xpose.msra.mxu0 0.0
    %219 = vmatpush.xpose.msra.mxu0 0.0
    %220 = vmatpush.xpose.msra.mxu0 0.0
    %221 = vmatpush.xpose.msra.mxu0 0.0
    %222 = vmatpush.xpose.msra.mxu0 0.0
    %223 = vmatpush.xpose.msra.mxu0 0.0
    %224 = vmatpush.xpose.msra.mxu0 %v207
    %225 = vmatmul.f32.gmra.mxu0 %v205
    %v226 = vpop.f32.mrf.mxu0
    %v227 = vadd.f32 %v106, %v226
    %228 = vdwg.mxu0
    %v229 = vsel %vm114, %v227, -inf
    %230 = vmax.xlane.f32.xlu0 %v229
    %v231 = vpop.xlane.xlu0 %230
    %v232 = vsub.f32 %v227, %v231
    %v233 = vmul.f32 %v232, 1.442695
    %v234 = vpow.pop %v233
    %v235 = vsel %vm114, %v234, 0.0
    %236 = vadd.xlane.f32.xlu0 %v235
    %v237 = vpop.xlane.xlu0 %236
    %v238 = vrcp.pop %v237
    %v239 = vmul.f32 %v234, %v238
    %240 = vrot.lane.b32.xlu0 %v96, 56
    %v241 = vpop.permute.xlu0 %240
    %v244 = vsel %vm114, %v239, 0
    %246 = vmatpush.msra.mxu0 0.0
    %247 = vmatpush.msra.mxu0 0.0
    %248 = vmatpush.msra.mxu0 0.0
    %249 = vmatpush.msra.mxu0 0.0
    %250 = vmatpush.msra.mxu0 0.0
    %251 = vmatpush.msra.mxu0 0.0
    %252 = vmatpush.msra.mxu0 0.0
    %253 = vmatpush.msra.mxu0 0.0
    %254 = vmatpush.msra.mxu0 0.0
    %255 = vmatpush.msra.mxu0 0.0
    %256 = vmatpush.msra.mxu0 0.0
    %257 = vmatpush.msra.mxu0 0.0
    %258 = vmatpush.msra.mxu0 0.0
    %259 = vmatpush.msra.mxu0 0.0
    %260 = vmatpush.msra.mxu0 0.0
    %261 = vmatpush.msra.mxu0 %v241
    %262 = vmatmul.f32.gmra.mxu0 %v244
    %v263 = vpop.f32.mrf.mxu0
    %v264 = vadd.f32 0.0, %v263
    %265 = vdwg.mxu0
    %v266 = vld [vmem:[#allocation7 + $0x8] sm:$0xff]
    %v268 = vsel %vm114, %v264, 0
    %270 = vmatpush.msra.mxu0 0.0
    %271 = vmatpush.msra.mxu0 0.0
    %272 = vmatpush.msra.mxu0 0.0
    %273 = vmatpush.msra.mxu0 0.0
    %274 = vmatpush.msra.mxu0 0.0
    %275 = vmatpush.msra.mxu0 0.0
    %276 = vmatpush.msra.mxu0 0.0
    %277 = vmatpush.msra.mxu0 0.0
    %278 = vmatpush.msra.mxu0 0.0
    %279 = vmatpush.msra.mxu0 0.0
    %280 = vmatpush.msra.mxu0 0.0
    %281 = vmatpush.msra.mxu0 0.0
    %282 = vmatpush.msra.mxu0 0.0
    %283 = vmatpush.msra.mxu0 0.0
    %284 = vmatpush.msra.mxu0 0.0
    %285 = vmatpush.msra.mxu0 %v266
    %286 = vmatmul.f32.gmra.mxu0 %v268
    %v287 = vpop.f32.mrf.mxu0
    %v288 = vadd.f32 0.0, %v287
    %289 = vdwg.mxu0
    %v290 = vadd.f32 %v200, %v288
    %291 = vrot.lane.b32.xlu0 %v96, 112
    %v292 = vpop.permute.xlu0 %291
    %293 = vrot.lane.b32.xlu0 %v96, 80
    %v294 = vpop.permute.xlu0 %293
    %v295 = vsel %vm114, %v292, 0
    %v297 = vsel %vm114, %v294, 0
    %299 = vmatpush.xpose.msra.mxu0 0.0
    %300 = vmatpush.xpose.msra.mxu0 0.0
    %301 = vmatpush.xpose.msra.mxu0 0.0
    %302 = vmatpush.xpose.msra.mxu0 0.0
    %303 = vmatpush.xpose.msra.mxu0 0.0
    %304 = vmatpush.xpose.msra.mxu0 0.0
    %305 = vmatpush.xpose.msra.mxu0 0.0
    %306 = vmatpush.xpose.msra.mxu0 0.0
    %307 = vmatpush.xpose.msra.mxu0 0.0
    %308 = vmatpush.xpose.msra.mxu0 0.0
    %309 = vmatpush.xpose.msra.mxu0 0.0
    %310 = vmatpush.xpose.msra.mxu0 0.0
    %311 = vmatpush.xpose.msra.mxu0 0.0
    %312 = vmatpush.xpose.msra.mxu0 0.0
    %313 = vmatpush.xpose.msra.mxu0 0.0
    %314 = vmatpush.xpose.msra.mxu0 %v297
    %315 = vmatmul.f32.gmra.mxu0 %v295
    %v316 = vpop.f32.mrf.mxu0
    %v317 = vadd.f32 %v106, %v316
    %318 = vdwg.mxu0
    %v319 = vsel %vm114, %v317, -inf
    %320 = vmax.xlane.f32.xlu0 %v319
    %v321 = vpop.xlane.xlu0 %320
    %v322 = vsub.f32 %v317, %v321
    %v323 = vmul.f32 %v322, 1.442695
    %v324 = vpow.pop %v323
    %v325 = vsel %vm114, %v324, 0.0
    %326 = vadd.xlane.f32.xlu0 %v325
    %v327 = vpop.xlane.xlu0 %326
    %v328 = vrcp.pop %v327
    %v329 = vmul.f32 %v324, %v328
    %330 = vrot.lane.b32.xlu0 %v96, 48
    %v331 = vpop.permute.xlu0 %330
    %v334 = vsel %vm114, %v329, 0
    %336 = vmatpush.msra.mxu0 0.0
    %337 = vmatpush.msra.mxu0 0.0
    %338 = vmatpush.msra.mxu0 0.0
    %339 = vmatpush.msra.mxu0 0.0
    %340 = vmatpush.msra.mxu0 0.0
    %341 = vmatpush.msra.mxu0 0.0
    %342 = vmatpush.msra.mxu0 0.0
    %343 = vmatpush.msra.mxu0 0.0
    %344 = vmatpush.msra.mxu0 0.0
    %345 = vmatpush.msra.mxu0 0.0
    %346 = vmatpush.msra.mxu0 0.0
    %347 = vmatpush.msra.mxu0 0.0
    %348 = vmatpush.msra.mxu0 0.0
    %349 = vmatpush.msra.mxu0 0.0
    %350 = vmatpush.msra.mxu0 0.0
    %351 = vmatpush.msra.mxu0 %v331
    %352 = vmatmul.f32.gmra.mxu0 %v334
    %v353 = vpop.f32.mrf.mxu0
    %v354 = vadd.f32 0.0, %v353
    %355 = vdwg.mxu0
    %v356 = vld [vmem:[#allocation7 + $0x10] sm:$0xff]
    %v358 = vsel %vm114, %v354, 0
    %360 = vmatpush.msra.mxu0 0.0
    %361 = vmatpush.msra.mxu0 0.0
    %362 = vmatpush.msra.mxu0 0.0
    %363 = vmatpush.msra.mxu0 0.0
    %364 = vmatpush.msra.mxu0 0.0
    %365 = vmatpush.msra.mxu0 0.0
    %366 = vmatpush.msra.mxu0 0.0
    %367 = vmatpush.msra.mxu0 0.0
    %368 = vmatpush.msra.mxu0 0.0
    %369 = vmatpush.msra.mxu0 0.0
    %370 = vmatpush.msra.mxu0 0.0
    %371 = vmatpush.msra.mxu0 0.0
    %372 = vmatpush.msra.mxu0 0.0
    %373 = vmatpush.msra.mxu0 0.0
    %374 = vmatpush.msra.mxu0 0.0
    %375 = vmatpush.msra.mxu0 %v356
    %376 = vmatmul.f32.gmra.mxu0 %v358
    %v377 = vpop.f32.mrf.mxu0
    %v378 = vadd.f32 0.0, %v377
    %379 = vdwg.mxu0
    %v380 = vadd.f32 %v290, %v378
    %381 = vrot.lane.b32.xlu0 %v96, 104
    %v382 = vpop.permute.xlu0 %381
    %383 = vrot.lane.b32.xlu0 %v96, 72
    %v384 = vpop.permute.xlu0 %383
    %v385 = vsel %vm114, %v382, 0
    %v387 = vsel %vm114, %v384, 0
    %389 = vmatpush.xpose.msra.mxu0 0.0
    %390 = vmatpush.xpose.msra.mxu0 0.0
    %391 = vmatpush.xpose.msra.mxu0 0.0
    %392 = vmatpush.xpose.msra.mxu0 0.0
    %393 = vmatpush.xpose.msra.mxu0 0.0
    %394 = vmatpush.xpose.msra.mxu0 0.0
    %395 = vmatpush.xpose.msra.mxu0 0.0
    %396 = vmatpush.xpose.msra.mxu0 0.0
    %397 = vmatpush.xpose.msra.mxu0 0.0
    %398 = vmatpush.xpose.msra.mxu0 0.0
    %399 = vmatpush.xpose.msra.mxu0 0.0
    %400 = vmatpush.xpose.msra.mxu0 0.0
    %401 = vmatpush.xpose.msra.mxu0 0.0
    %402 = vmatpush.xpose.msra.mxu0 0.0
    %403 = vmatpush.xpose.msra.mxu0 0.0
    %404 = vmatpush.xpose.msra.mxu0 %v387
    %405 = vmatmul.f32.gmra.mxu0 %v385
    %v406 = vpop.f32.mrf.mxu0
    %v407 = vadd.f32 %v106, %v406
    %408 = vdwg.mxu0
    %v409 = vsel %vm114, %v407, -inf
    %410 = vmax.xlane.f32.xlu0 %v409
    %v411 = vpop.xlane.xlu0 %410
    %v412 = vsub.f32 %v407, %v411
    %v413 = vmul.f32 %v412, 1.442695
    %v414 = vpow.pop %v413
    %v415 = vsel %vm114, %v414, 0.0
    %416 = vadd.xlane.f32.xlu0 %v415
    %v417 = vpop.xlane.xlu0 %416
    %v418 = vrcp.pop %v417
    %v419 = vmul.f32 %v414, %v418
    %420 = vrot.lane.b32.xlu0 %v96, 40
    %v421 = vpop.permute.xlu0 %420
    %v424 = vsel %vm114, %v419, 0
    %426 = vmatpush.msra.mxu0 0.0
    %427 = vmatpush.msra.mxu0 0.0
    %428 = vmatpush.msra.mxu0 0.0
    %429 = vmatpush.msra.mxu0 0.0
    %430 = vmatpush.msra.mxu0 0.0
    %431 = vmatpush.msra.mxu0 0.0
    %432 = vmatpush.msra.mxu0 0.0
    %433 = vmatpush.msra.mxu0 0.0
    %434 = vmatpush.msra.mxu0 0.0
    %435 = vmatpush.msra.mxu0 0.0
    %436 = vmatpush.msra.mxu0 0.0
    %437 = vmatpush.msra.mxu0 0.0
    %438 = vmatpush.msra.mxu0 0.0
    %439 = vmatpush.msra.mxu0 0.0
    %440 = vmatpush.msra.mxu0 0.0
    %441 = vmatpush.msra.mxu0 %v421
    %442 = vmatmul.f32.gmra.mxu0 %v424
    %v443 = vpop.f32.mrf.mxu0
    %v444 = vadd.f32 0.0, %v443
    %445 = vdwg.mxu0
    %v446 = vld [vmem:[#allocation7 + $0x18] sm:$0xff]
    %v448 = vsel %vm114, %v444, 0
    %450 = vmatpush.msra.mxu0 0.0
    %451 = vmatpush.msra.mxu0 0.0
    %452 = vmatpush.msra.mxu0 0.0
    %453 = vmatpush.msra.mxu0 0.0
    %454 = vmatpush.msra.mxu0 0.0
    %455 = vmatpush.msra.mxu0 0.0
    %456 = vmatpush.msra.mxu0 0.0
    %457 = vmatpush.msra.mxu0 0.0
    %458 = vmatpush.msra.mxu0 0.0
    %459 = vmatpush.msra.mxu0 0.0
    %460 = vmatpush.msra.mxu0 0.0
    %461 = vmatpush.msra.mxu0 0.0
    %462 = vmatpush.msra.mxu0 0.0
    %463 = vmatpush.msra.mxu0 0.0
    %464 = vmatpush.msra.mxu0 0.0
    %465 = vmatpush.msra.mxu0 %v446
    %466 = vmatmul.f32.gmra.mxu0 %v448
    %v467 = vpop.f32.mrf.mxu0
    %v468 = vadd.f32 0.0, %v467
    %469 = vdwg.mxu0
    %v470 = vadd.f32 %v380, %v468
    %471 = vst.msk [vmem:[#allocation8] sm:$0xff] %vm71, %v470
    %473 = vrot.lane.b32.xlu0 %v99, 96
    %v474 = vpop.permute.xlu0 %473
    %v475 = vsel %vm114, %v99, 0
    %v477 = vsel %vm114, %v474, 0
    %479 = vmatpush.xpose.msra.mxu0 0.0
    %480 = vmatpush.xpose.msra.mxu0 0.0
    %481 = vmatpush.xpose.msra.mxu0 0.0
    %482 = vmatpush.xpose.msra.mxu0 0.0
    %483 = vmatpush.xpose.msra.mxu0 0.0
    %484 = vmatpush.xpose.msra.mxu0 0.0
    %485 = vmatpush.xpose.msra.mxu0 0.0
    %486 = vmatpush.xpose.msra.mxu0 0.0
    %487 = vmatpush.xpose.msra.mxu0 0.0
    %488 = vmatpush.xpose.msra.mxu0 0.0
    %489 = vmatpush.xpose.msra.mxu0 0.0
    %490 = vmatpush.xpose.msra.mxu0 0.0
    %491 = vmatpush.xpose.msra.mxu0 0.0
    %492 = vmatpush.xpose.msra.mxu0 0.0
    %493 = vmatpush.xpose.msra.mxu0 0.0
    %494 = vmatpush.xpose.msra.mxu0 %v477
    %495 = vmatmul.f32.gmra.mxu0 %v475
    %v496 = vpop.f32.mrf.mxu0
    %v497 = vadd.f32 %v106, %v496
    %498 = vdwg.mxu0
    %v499 = vsel %vm114, %v497, -inf
    %500 = vmax.xlane.f32.xlu0 %v499
    %v501 = vpop.xlane.xlu0 %500
    %v502 = vsub.f32 %v497, %v501
    %v503 = vmul.f32 %v502, 1.442695
    %v504 = vpow.pop %v503
    %v505 = vsel %vm114, %v504, 0.0
    %506 = vadd.xlane.f32.xlu0 %v505
    %v507 = vpop.xlane.xlu0 %506
    %v508 = vrcp.pop %v507
    %v509 = vmul.f32 %v504, %v508
    %510 = vrot.lane.b32.xlu0 %v99, 64
    %v511 = vpop.permute.xlu0 %510
    %v514 = vsel %vm114, %v509, 0
    %516 = vmatpush.msra.mxu0 0.0
    %517 = vmatpush.msra.mxu0 0.0
    %518 = vmatpush.msra.mxu0 0.0
    %519 = vmatpush.msra.mxu0 0.0
    %520 = vmatpush.msra.mxu0 0.0
    %521 = vmatpush.msra.mxu0 0.0
    %522 = vmatpush.msra.mxu0 0.0
    %523 = vmatpush.msra.mxu0 0.0
    %524 = vmatpush.msra.mxu0 0.0
    %525 = vmatpush.msra.mxu0 0.0
    %526 = vmatpush.msra.mxu0 0.0
    %527 = vmatpush.msra.mxu0 0.0
    %528 = vmatpush.msra.mxu0 0.0
    %529 = vmatpush.msra.mxu0 0.0
    %530 = vmatpush.msra.mxu0 0.0
    %531 = vmatpush.msra.mxu0 %v511
    %532 = vmatmul.f32.gmra.mxu0 %v514
    %v533 = vpop.f32.mrf.mxu0
    %v534 = vadd.f32 0.0, %v533
    %535 = vdwg.mxu0
    %v536 = vld [vmem:[#allocation7] sm:$0xff]
    %v538 = vsel %vm114, %v534, 0
    %540 = vmatpush.msra.mxu0 0.0
    %541 = vmatpush.msra.mxu0 0.0
    %542 = vmatpush.msra.mxu0 0.0
    %543 = vmatpush.msra.mxu0 0.0
    %544 = vmatpush.msra.mxu0 0.0
    %545 = vmatpush.msra.mxu0 0.0
    %546 = vmatpush.msra.mxu0 0.0
    %547 = vmatpush.msra.mxu0 0.0
    %548 = vmatpush.msra.mxu0 0.0
    %549 = vmatpush.msra.mxu0 0.0
    %550 = vmatpush.msra.mxu0 0.0
    %551 = vmatpush.msra.mxu0 0.0
    %552 = vmatpush.msra.mxu0 0.0
    %553 = vmatpush.msra.mxu0 0.0
    %554 = vmatpush.msra.mxu0 0.0
    %555 = vmatpush.msra.mxu0 %v536
    %556 = vmatmul.f32.gmra.mxu0 %v538
    %v557 = vpop.f32.mrf.mxu0
    %v558 = vadd.f32 0.0, %v557
    %559 = vdwg.mxu0
    %v560 = vadd.f32 %v109, %v558
    %561 = vrot.lane.b32.xlu0 %v99, 120
    %v562 = vpop.permute.xlu0 %561
    %563 = vrot.lane.b32.xlu0 %v99, 88
    %v564 = vpop.permute.xlu0 %563
    %v565 = vsel %vm114, %v562, 0
    %v567 = vsel %vm114, %v564, 0
    %569 = vmatpush.xpose.msra.mxu0 0.0
    %570 = vmatpush.xpose.msra.mxu0 0.0
    %571 = vmatpush.xpose.msra.mxu0 0.0
    %572 = vmatpush.xpose.msra.mxu0 0.0
    %573 = vmatpush.xpose.msra.mxu0 0.0
    %574 = vmatpush.xpose.msra.mxu0 0.0
    %575 = vmatpush.xpose.msra.mxu0 0.0
    %576 = vmatpush.xpose.msra.mxu0 0.0
    %577 = vmatpush.xpose.msra.mxu0 0.0
    %578 = vmatpush.xpose.msra.mxu0 0.0
    %579 = vmatpush.xpose.msra.mxu0 0.0
    %580 = vmatpush.xpose.msra.mxu0 0.0
    %581 = vmatpush.xpose.msra.mxu0 0.0
    %582 = vmatpush.xpose.msra.mxu0 0.0
    %583 = vmatpush.xpose.msra.mxu0 0.0
    %584 = vmatpush.xpose.msra.mxu0 %v567
    %585 = vmatmul.f32.gmra.mxu0 %v565
    %v586 = vpop.f32.mrf.mxu0
    %v587 = vadd.f32 %v106, %v586
    %588 = vdwg.mxu0
    %v589 = vsel %vm114, %v587, -inf
    %590 = vmax.xlane.f32.xlu0 %v589
    %v591 = vpop.xlane.xlu0 %590
    %v592 = vsub.f32 %v587, %v591
    %v593 = vmul.f32 %v592, 1.442695
    %v594 = vpow.pop %v593
    %v595 = vsel %vm114, %v594, 0.0
    %596 = vadd.xlane.f32.xlu0 %v595
    %v597 = vpop.xlane.xlu0 %596
    %v598 = vrcp.pop %v597
    %v599 = vmul.f32 %v594, %v598
    %600 = vrot.lane.b32.xlu0 %v99, 56
    %v601 = vpop.permute.xlu0 %600
    %v604 = vsel %vm114, %v599, 0
    %606 = vmatpush.msra.mxu0 0.0
    %607 = vmatpush.msra.mxu0 0.0
    %608 = vmatpush.msra.mxu0 0.0
    %609 = vmatpush.msra.mxu0 0.0
    %610 = vmatpush.msra.mxu0 0.0
    %611 = vmatpush.msra.mxu0 0.0
    %612 = vmatpush.msra.mxu0 0.0
    %613 = vmatpush.msra.mxu0 0.0
    %614 = vmatpush.msra.mxu0 0.0
    %615 = vmatpush.msra.mxu0 0.0
    %616 = vmatpush.msra.mxu0 0.0
    %617 = vmatpush.msra.mxu0 0.0
    %618 = vmatpush.msra.mxu0 0.0
    %619 = vmatpush.msra.mxu0 0.0
    %620 = vmatpush.msra.mxu0 0.0
    %621 = vmatpush.msra.mxu0 %v601
    %622 = vmatmul.f32.gmra.mxu0 %v604
    %v623 = vpop.f32.mrf.mxu0
    %v624 = vadd.f32 0.0, %v623
    %625 = vdwg.mxu0
    %v626 = vld [vmem:[#allocation7 + $0x8] sm:$0xff]
    %v628 = vsel %vm114, %v624, 0
    %630 = vmatpush.msra.mxu0 0.0
    %631 = vmatpush.msra.mxu0 0.0
    %632 = vmatpush.msra.mxu0 0.0
    %633 = vmatpush.msra.mxu0 0.0
    %634 = vmatpush.msra.mxu0 0.0
    %635 = vmatpush.msra.mxu0 0.0
    %636 = vmatpush.msra.mxu0 0.0
    %637 = vmatpush.msra.mxu0 0.0
    %638 = vmatpush.msra.mxu0 0.0
    %639 = vmatpush.msra.mxu0 0.0
    %640 = vmatpush.msra.mxu0 0.0
    %641 = vmatpush.msra.mxu0 0.0
    %642 = vmatpush.msra.mxu0 0.0
    %643 = vmatpush.msra.mxu0 0.0
    %644 = vmatpush.msra.mxu0 0.0
    %645 = vmatpush.msra.mxu0 %v626
    %646 = vmatmul.f32.gmra.mxu0 %v628
    %v647 = vpop.f32.mrf.mxu0
    %v648 = vadd.f32 0.0, %v647
    %649 = vdwg.mxu0
    %v650 = vadd.f32 %v560, %v648
    %651 = vrot.lane.b32.xlu0 %v99, 112
    %v652 = vpop.permute.xlu0 %651
    %653 = vrot.lane.b32.xlu0 %v99, 80
    %v654 = vpop.permute.xlu0 %653
    %v655 = vsel %vm114, %v652, 0
    %v657 = vsel %vm114, %v654, 0
    %659 = vmatpush.xpose.msra.mxu0 0.0
    %660 = vmatpush.xpose.msra.mxu0 0.0
    %661 = vmatpush.xpose.msra.mxu0 0.0
    %662 = vmatpush.xpose.msra.mxu0 0.0
    %663 = vmatpush.xpose.msra.mxu0 0.0
    %664 = vmatpush.xpose.msra.mxu0 0.0
    %665 = vmatpush.xpose.msra.mxu0 0.0
    %666 = vmatpush.xpose.msra.mxu0 0.0
    %667 = vmatpush.xpose.msra.mxu0 0.0
    %668 = vmatpush.xpose.msra.mxu0 0.0
    %669 = vmatpush.xpose.msra.mxu0 0.0
    %670 = vmatpush.xpose.msra.mxu0 0.0
    %671 = vmatpush.xpose.msra.mxu0 0.0
    %672 = vmatpush.xpose.msra.mxu0 0.0
    %673 = vmatpush.xpose.msra.mxu0 0.0
    %674 = vmatpush.xpose.msra.mxu0 %v657
    %675 = vmatmul.f32.gmra.mxu0 %v655
    %v676 = vpop.f32.mrf.mxu0
    %v677 = vadd.f32 %v106, %v676
    %678 = vdwg.mxu0
    %v679 = vsel %vm114, %v677, -inf
    %680 = vmax.xlane.f32.xlu0 %v679
    %v681 = vpop.xlane.xlu0 %680
    %v682 = vsub.f32 %v677, %v681
    %v683 = vmul.f32 %v682, 1.442695
    %v684 = vpow.pop %v683
    %v685 = vsel %vm114, %v684, 0.0
    %686 = vadd.xlane.f32.xlu0 %v685
    %v687 = vpop.xlane.xlu0 %686
    %v688 = vrcp.pop %v687
    %v689 = vmul.f32 %v684, %v688
    %690 = vrot.lane.b32.xlu0 %v99, 48
    %v691 = vpop.permute.xlu0 %690
    %v694 = vsel %vm114, %v689, 0
    %696 = vmatpush.msra.mxu0 0.0
    %697 = vmatpush.msra.mxu0 0.0
    %698 = vmatpush.msra.mxu0 0.0
    %699 = vmatpush.msra.mxu0 0.0
    %700 = vmatpush.msra.mxu0 0.0
    %701 = vmatpush.msra.mxu0 0.0
    %702 = vmatpush.msra.mxu0 0.0
    %703 = vmatpush.msra.mxu0 0.0
    %704 = vmatpush.msra.mxu0 0.0
    %705 = vmatpush.msra.mxu0 0.0
    %706 = vmatpush.msra.mxu0 0.0
    %707 = vmatpush.msra.mxu0 0.0
    %708 = vmatpush.msra.mxu0 0.0
    %709 = vmatpush.msra.mxu0 0.0
    %710 = vmatpush.msra.mxu0 0.0
    %711 = vmatpush.msra.mxu0 %v691
    %712 = vmatmul.f32.gmra.mxu0 %v694
    %v713 = vpop.f32.mrf.mxu0
    %v714 = vadd.f32 0.0, %v713
    %715 = vdwg.mxu0
    %v716 = vld [vmem:[#allocation7 + $0x10] sm:$0xff]
    %v718 = vsel %vm114, %v714, 0
    %720 = vmatpush.msra.mxu0 0.0
    %721 = vmatpush.msra.mxu0 0.0
    %722 = vmatpush.msra.mxu0 0.0
    %723 = vmatpush.msra.mxu0 0.0
    %724 = vmatpush.msra.mxu0 0.0
    %725 = vmatpush.msra.mxu0 0.0
    %726 = vmatpush.msra.mxu0 0.0
    %727 = vmatpush.msra.mxu0 0.0
    %728 = vmatpush.msra.mxu0 0.0
    %729 = vmatpush.msra.mxu0 0.0
    %730 = vmatpush.msra.mxu0 0.0
    %731 = vmatpush.msra.mxu0 0.0
    %732 = vmatpush.msra.mxu0 0.0
    %733 = vmatpush.msra.mxu0 0.0
    %734 = vmatpush.msra.mxu0 0.0
    %735 = vmatpush.msra.mxu0 %v716
    %736 = vmatmul.f32.gmra.mxu0 %v718
    %v737 = vpop.f32.mrf.mxu0
    %v738 = vadd.f32 0.0, %v737
    %739 = vdwg.mxu0
    %v740 = vadd.f32 %v650, %v738
    %741 = vrot.lane.b32.xlu0 %v99, 104
    %v742 = vpop.permute.xlu0 %741
    %743 = vrot.lane.b32.xlu0 %v99, 72
    %v744 = vpop.permute.xlu0 %743
    %v745 = vsel %vm114, %v742, 0
    %v747 = vsel %vm114, %v744, 0
    %749 = vmatpush.xpose.msra.mxu0 0.0
    %750 = vmatpush.xpose.msra.mxu0 0.0
    %751 = vmatpush.xpose.msra.mxu0 0.0
    %752 = vmatpush.xpose.msra.mxu0 0.0
    %753 = vmatpush.xpose.msra.mxu0 0.0
    %754 = vmatpush.xpose.msra.mxu0 0.0
    %755 = vmatpush.xpose.msra.mxu0 0.0
    %756 = vmatpush.xpose.msra.mxu0 0.0
    %757 = vmatpush.xpose.msra.mxu0 0.0
    %758 = vmatpush.xpose.msra.mxu0 0.0
    %759 = vmatpush.xpose.msra.mxu0 0.0
    %760 = vmatpush.xpose.msra.mxu0 0.0
    %761 = vmatpush.xpose.msra.mxu0 0.0
    %762 = vmatpush.xpose.msra.mxu0 0.0
    %763 = vmatpush.xpose.msra.mxu0 0.0
    %764 = vmatpush.xpose.msra.mxu0 %v747
    %765 = vmatmul.f32.gmra.mxu0 %v745
    %v766 = vpop.f32.mrf.mxu0
    %v767 = vadd.f32 %v106, %v766
    %768 = vdwg.mxu0
    %v769 = vsel %vm114, %v767, -inf
    %770 = vmax.xlane.f32.xlu0 %v769
    %v771 = vpop.xlane.xlu0 %770
    %v772 = vsub.f32 %v767, %v771
    %v773 = vmul.f32 %v772, 1.442695
    %v774 = vpow.pop %v773
    %v775 = vsel %vm114, %v774, 0.0
    %776 = vadd.xlane.f32.xlu0 %v775
    %v777 = vpop.xlane.xlu0 %776
    %v778 = vrcp.pop %v777
    %v779 = vmul.f32 %v774, %v778
    %780 = vrot.lane.b32.xlu0 %v99, 40
    %v781 = vpop.permute.xlu0 %780
    %v784 = vsel %vm114, %v779, 0
    %786 = vmatpush.msra.mxu0 0.0
    %787 = vmatpush.msra.mxu0 0.0
    %788 = vmatpush.msra.mxu0 0.0
    %789 = vmatpush.msra.mxu0 0.0
    %790 = vmatpush.msra.mxu0 0.0
    %791 = vmatpush.msra.mxu0 0.0
    %792 = vmatpush.msra.mxu0 0.0
    %793 = vmatpush.msra.mxu0 0.0
    %794 = vmatpush.msra.mxu0 0.0
    %795 = vmatpush.msra.mxu0 0.0
    %796 = vmatpush.msra.mxu0 0.0
    %797 = vmatpush.msra.mxu0 0.0
    %798 = vmatpush.msra.mxu0 0.0
    %799 = vmatpush.msra.mxu0 0.0
    %800 = vmatpush.msra.mxu0 0.0
    %801 = vmatpush.msra.mxu0 %v781
    %802 = vmatmul.f32.gmra.mxu0 %v784
    %v803 = vpop.f32.mrf.mxu0
    %v804 = vadd.f32 0.0, %v803
    %805 = vdwg.mxu0
    %v806 = vld [vmem:[#allocation7 + $0x18] sm:$0xff]
    %v808 = vsel %vm114, %v804, 0
    %810 = vmatpush.msra.mxu0 0.0
    %811 = vmatpush.msra.mxu0 0.0
    %812 = vmatpush.msra.mxu0 0.0
    %813 = vmatpush.msra.mxu0 0.0
    %814 = vmatpush.msra.mxu0 0.0
    %815 = vmatpush.msra.mxu0 0.0
    %816 = vmatpush.msra.mxu0 0.0
    %817 = vmatpush.msra.mxu0 0.0
    %818 = vmatpush.msra.mxu0 0.0
    %819 = vmatpush.msra.mxu0 0.0
    %820 = vmatpush.msra.mxu0 0.0
    %821 = vmatpush.msra.mxu0 0.0
    %822 = vmatpush.msra.mxu0 0.0
    %823 = vmatpush.msra.mxu0 0.0
    %824 = vmatpush.msra.mxu0 0.0
    %825 = vmatpush.msra.mxu0 %v806
    %826 = vmatmul.f32.gmra.mxu0 %v808
    %v827 = vpop.f32.mrf.mxu0
    %v828 = vadd.f32 0.0, %v827
    %829 = vdwg.mxu0
    %v830 = vadd.f32 %v740, %v828
    %831 = vst.msk [vmem:[#allocation8 + $0x8] sm:$0xff] %vm71, %v830
    // Predicated region
    $region30: #{tpu_custom_call.1} parent=1 // pred_check
      _
    $region31: #{tpu_custom_call.1} parent=1 // pred_check_branch
      %833 = sbr.rel (0) target = $region33
    $region32: #{tpu_custom_call.1} parent=1 // pred_region
      %835 = vsyncadd [#allocation4], 0
      %s836 = sshll.u32 [#allocation8], 4
      %s837 = int_to_ptr.vmem [resolvable:$true] %s836
      %s838 = sshll.u32 %s4, 4
      %s839 = int_to_ptr.hbm [resolvable:$true] %s838
      %844 = dma.vmem_to_hbm [thread:$0]  %s837, 256, %s839, [#allocation4], 128, 128, 8
    $region33: #{tpu_custom_call.1} parent=1 // pred_fallthru
      _
    // Predicated region
    $region34: #{tpu_custom_call.1} parent=1 // pred_check
      _
    $region35: #{tpu_custom_call.1} parent=1 // pred_check_branch
      %846 = sbr.rel (0) target = $region37
    $region36: #{tpu_custom_call.1} parent=1 // pred_region
      %848 = dma.done [#allocation4], 256
    $region37: #{tpu_custom_call.1} parent=1 // pred_fallthru
      _
    %849 = vsyncpa [#allocation3], 1
    %850 = vsyncpa [#allocation6], 1
    %851 = vsyncpa [#allocation4], 1

</llo_original>
